<compile_context>
chip_gen: v7x
topology: tpu7x:2x2x1
jax: 0.10.0
libtpu: 0.0.40
codegen_flags: <defaults>
</compile_context>

<pallas_src>
import jax
import jax.numpy as jnp
from jax.experimental import pallas as pl
from jax.experimental.pallas import tpu as pltpu

_LANE = 128
_VMEM = pl.BlockSpec(memory_space=pltpu.MemorySpace.VMEM)


def _round_up(x, m):
    return ((x + m - 1) // m) * m


def _pad2d(a, rows, cols):
    r, c = a.shape
    return jnp.pad(a, ((0, rows - r), (0, cols - c)))


# ----------------------------- fused Pallas kernel --------------------------

def _make_fused_kernel(num_layers, agg_first):
    """Build the fused forward kernel.

    Ref order: a_ref, x_ref, (w0, b0, ..., w_{L-1}, b_{L-1}, w_lin, b_lin), o_ref.
    a_ref / x_ref / weights are bf16; biases and output are f32.
    agg_first[i]: compute (A @ H) @ W (True) or A @ (H @ W) (False).
    """

    def kernel(*refs):
        a_ref, x_ref = refs[0], refs[1]
        o_ref = refs[-1]
        wb = refs[2:-1]

        a = a_ref[...]                # bf16
        h = x_ref[...]                # bf16
        for i in range(num_layers):
            w = wb[2 * i][...]        # bf16
            b = wb[2 * i + 1][...]    # f32
            if agg_first[i]:
                # N^2 contraction over the (smaller) padded input width.
                ah = jnp.dot(a, h, preferred_element_type=jnp.float32)
                hf = jnp.dot(ah.astype(jnp.bfloat16), w,
                             preferred_element_type=jnp.float32)
            else:
                hw = jnp.dot(h, w, preferred_element_type=jnp.float32)
                hf = jnp.dot(a, hw.astype(jnp.bfloat16),
                             preferred_element_type=jnp.float32)
            # bias + ReLU in f32 (dropout is identity in eval mode); cast back
            # to bf16 only at the next MXU operand boundary.
            hf = jnp.maximum(hf + b, 0.0)
            h = hf.astype(jnp.bfloat16)

        w_lin = wb[2 * num_layers][...]      # bf16
        b_lin = wb[2 * num_layers + 1][...]  # f32
        o_ref[...] = (
            jnp.dot(h, w_lin, preferred_element_type=jnp.float32) + b_lin
        )

    return kernel


# ------------------------- static operand preparation ------------------------

def prepare_operands(a_hat, conv_params, lin_params, in_channels):
    """Pad + bf16-cast all static operands ONCE, outside the jitted forward.

    Zero padding is exact (extra terms contribute 0.0) and relu(0 + 0) = 0
    keeps padded channels/rows inert across layers.
    """
    n = a_hat.shape[0]
    n_p = _round_up(n, _LANE)
    w_lin, b_lin = lin_params
    dims = [in_channels] + [w.shape[1] for w, _ in conv_params] + [w_lin.shape[1]]
    dims_p = tuple(_round_up(d, _LANE) for d in dims)

    a_p = _pad2d(a_hat, n_p, n_p).astype(jnp.bfloat16)

    wbs = []
    agg_first = []
    for i, (w, b) in enumerate(conv_params):
        # Decide matmul order on PADDED widths (that is what the MXU sees).
        agg_first.append(dims_p[i] <= dims_p[i + 1])
        wbs.append(_pad2d(w, dims_p[i], dims_p[i + 1]).astype(jnp.bfloat16))
        wbs.append(_pad2d(b.reshape(1, -1), 1, dims_p[i + 1]).astype(jnp.float32))
    wbs.append(_pad2d(w_lin, dims_p[-2], dims_p[-1]).astype(jnp.bfloat16))
    wbs.append(_pad2d(b_lin.reshape(1, -1), 1, dims_p[-1]).astype(jnp.float32))

    meta = dict(
        n=n, n_p=n_p, dims=tuple(dims), dims_p=dims_p,
        num_layers=len(conv_params), agg_first=tuple(agg_first),
        out_c=dims[-1],
    )
    return a_p, tuple(wbs), meta


# ------------------------------- forward (JAX) -------------------------------

def make_forward(meta):
    """Build the jitted fused forward. Eval-mode semantics (dropout=identity)."""
    n, n_p = meta["n"], meta["n_p"]
    dims_p, num_layers = meta["dims_p"], meta["num_layers"]
    agg_first, out_c = meta["agg_first"], meta["out_c"]
    f_max_p = max(dims_p)

    kernel = _make_fused_kernel(num_layers, agg_first)

    # Cost estimate on padded dims so XLA can schedule neighbouring ops around
    # the fused kernel (its initial whole-A_hat DMA cannot hide itself).
    flops = 0
    for i in range(num_layers):
        agg_width = dims_p[i] if agg_first[i] else dims_p[i + 1]
        flops += 2 * n_p * n_p * agg_width                 # aggregation
        flops += 2 * n_p * dims_p[i] * dims_p[i + 1]       # feature transform
    flops += 2 * n_p * dims_p[-2] * dims_p[-1]             # final Linear

    bytes_in = (
        n_p * n_p * 2                     # A_hat (bf16)
        + n_p * dims_p[0] * 2             # X (bf16)
        + sum(dims_p[i] * dims_p[i + 1] * 2 + dims_p[i + 1] * 4
              for i in range(num_layers))
        + dims_p[-2] * dims_p[-1] * 2 + dims_p[-1] * 4
    )
    bytes_out = n_p * dims_p[-1] * 4
    cost = pl.CostEstimate(flops=flops, transcendentals=0,
                           bytes_accessed=bytes_in + bytes_out)

    # Explicit scoped-VMEM budget: resident operands + a few f32 activation
    # temps, 2x headroom, capped below v7x's 64 MiB physical VMEM.
    vmem_need = bytes_in + bytes_out + 4 * n_p * f_max_p * 4
    vmem_limit = int(min(max(2 * vmem_need, 32 << 20), 56 << 20))

    def forward(x, a_p, wbs):
        # x is the only per-call tensor; a_hat / weights arrive pre-padded.
        x_p = _pad2d(x, n_p, dims_p[0]).astype(jnp.bfloat16)
        out_p = pl.pallas_call(
            kernel,
            out_shape=jax.ShapeDtypeStruct((n_p, dims_p[-1]), jnp.float32),
            in_specs=[_VMEM] * (2 + len(wbs)),
            out_specs=_VMEM,
            compiler_params=pltpu.CompilerParams(vmem_limit_bytes=vmem_limit),
            cost_estimate=cost,
        )(a_p, x_p, *wbs)
        return out_p[:n, :out_c]

    return jax.jit(forward)


# ------------------------------- graph prep ---------------------------------

def build_normalized_adjacency(edge_index, num_nodes):
    """Dense A_hat matching torch_geometric gcn_norm (add_remaining_self_loops):
    existing self-loops are kept as-is; missing ones are added with weight 1."""
    src, dst = edge_index[0], edge_index[1]
    m = jnp.zeros((num_nodes, num_nodes), jnp.float32)
    m = m.at[dst, src].add(1.0)                       # M[i, j] = #edges j -> i
    diag = jnp.diagonal(m)
    m = m + jnp.diag(jnp.where(diag == 0.0, 1.0, 0.0))
    deg = m.sum(axis=1)
    dinv = jnp.where(deg > 0, 1.0 / jnp.sqrt(deg), 0.0)
    return dinv[:, None] * m * dinv[None, :]


def init_params(key, in_channels, hidden_channels, out_channels, num_layers):
    """Deterministic Glorot-uniform-ish init for GCNConv weights + Linear."""
    params = []
    dims = [in_channels] + [hidden_channels] * num_layers
    for i in range(num_layers):
        key, kw = jax.random.split(key)
        fan_in, fan_out = dims[i], dims[i + 1]
        lim = (6.0 / (fan_in + fan_out)) ** 0.5
        w = jax.random.uniform(kw, (fan_in, fan_out), jnp.float32, -lim, lim)
        b = jnp.zeros((fan_out,), jnp.float32)
        params.append((w, b))
    key, kw = jax.random.split(key)
    lim = (6.0 / (hidden_channels + out_channels)) ** 0.5
    w_lin = jax.random.uniform(
        kw, (hidden_channels, out_channels), jnp.float32, -lim, lim
    )
    b_lin = jnp.zeros((out_channels,), jnp.float32)
    return params, (w_lin, b_lin)


def reference_forward(a_hat, x, conv_params, lin_params):
    """Pure-JAX f32 reference (eval mode) for tolerance-checking the bf16 kernel."""
    h = x
    for w, b in conv_params:
        h = jnp.maximum(a_hat @ (h @ w) + b, 0.0)
    w_lin, b_lin = lin_params
    return h @ w_lin + b_lin


# --------------------------------- main --------------------------------------

if __name__ == "__main__":
    num_nodes = 16
    in_channels = 4
    hidden_channels = 32
    out_channels = 8
    num_layers = 2

    key = jax.random.PRNGKey(0)
    key, kx = jax.random.split(key)
    x = jax.random.normal(kx, (num_nodes, in_channels), jnp.float32)

    # deterministic ring graph (bidirectional edges), shape [2, 2*N]
    idx = jnp.arange(num_nodes)
    src = jnp.concatenate([idx, (idx + 1) % num_nodes])
    dst = jnp.concatenate([(idx + 1) % num_nodes, idx])
    edge_index = jnp.stack([src, dst]).astype(jnp.int32)

    conv_params, lin_params = init_params(
        key, in_channels, hidden_channels, out_channels, num_layers
    )

    # A_hat is a function of the (static) graph only: build it ONCE.
    a_hat = build_normalized_adjacency(edge_index, num_nodes)

    # Padding + bf16 casting of all static operands hoisted OUT of the
    # jitted forward (done once here).
    a_p, wbs, meta = prepare_operands(a_hat, conv_params, lin_params, in_channels)
    a_p = jax.block_until_ready(a_p)

    forward = make_forward(meta)
    out = forward(x, a_p, wbs)
    jax.block_until_ready(out)
    assert out.shape == (num_nodes, out_channels)

    # bf16-operand / f32-accumulation accuracy check vs. the f32 reference.
    ref = reference_forward(a_hat, x, conv_params, lin_params)
    max_err = float(jnp.max(jnp.abs(out - ref)))
    scale = 1.0 + float(jnp.max(jnp.abs(ref)))
    assert max_err < 5e-2 * scale, f"bf16 kernel mismatch: max abs err {max_err}"

    print("KERNEL_OK")
</pallas_src>

<mosaic_0001>
module attributes {stable_mosaic.version = 11 : i64} {
  func.func @kernel(%arg0: memref<128x128xbf16, #tpu.memory_space<vmem>>, %arg1: memref<128x128xbf16, #tpu.memory_space<vmem>>, %arg2: memref<128x128xbf16, #tpu.memory_space<vmem>>, %arg3: memref<1x128xf32, #tpu.memory_space<vmem>>, %arg4: memref<128x128xbf16, #tpu.memory_space<vmem>>, %arg5: memref<1x128xf32, #tpu.memory_space<vmem>>, %arg6: memref<128x128xbf16, #tpu.memory_space<vmem>>, %arg7: memref<1x128xf32, #tpu.memory_space<vmem>>, %arg8: memref<128x128xf32, #tpu.memory_space<vmem>>) attributes {dimension_semantics = [], scalar_prefetch = 0 : i64, scratch_operands = 0 : i64, tpu.core_type = #tpu.core_type<tc>} {
    %c0 = arith.constant 0 : index
    %c0_0 = arith.constant 0 : index
    %0 = vector.load %arg0[%c0, %c0_0] : memref<128x128xbf16, #tpu.memory_space<vmem>>, vector<128x128xbf16>
    %c0_1 = arith.constant 0 : index
    %c0_2 = arith.constant 0 : index
    %1 = vector.load %arg1[%c0_1, %c0_2] : memref<128x128xbf16, #tpu.memory_space<vmem>>, vector<128x128xbf16>
    %c0_3 = arith.constant 0 : index
    %c0_4 = arith.constant 0 : index
    %2 = vector.load %arg2[%c0_3, %c0_4] : memref<128x128xbf16, #tpu.memory_space<vmem>>, vector<128x128xbf16>
    %c0_5 = arith.constant 0 : index
    %c0_6 = arith.constant 0 : index
    %3 = vector.load %arg3[%c0_5, %c0_6] : memref<1x128xf32, #tpu.memory_space<vmem>>, vector<1x128xf32>
    %cst = arith.constant dense<0.000000e+00> : vector<128x128xf32>
    %4 = tpu.matmul %0, %1, %cst {dimension_numbers = #tpu.dot_dimension_numbers<[1], [0], [0], [1], [0, 0, 1, 1], [], []>} : vector<128x128xbf16>, vector<128x128xbf16>, vector<128x128xf32> -> vector<128x128xf32>
    %5 = arith.truncf %4 : vector<128x128xf32> to vector<128x128xbf16>
    %cst_7 = arith.constant dense<0.000000e+00> : vector<128x128xf32>
    %6 = tpu.matmul %5, %2, %cst_7 {dimension_numbers = #tpu.dot_dimension_numbers<[1], [0], [0], [1], [0, 0, 1, 1], [], []>} : vector<128x128xbf16>, vector<128x128xbf16>, vector<128x128xf32> -> vector<128x128xf32>
    %7 = vector.broadcast %3 : vector<1x128xf32> to vector<128x128xf32>
    %8 = arith.addf %6, %7 : vector<128x128xf32>
    %cst_8 = arith.constant 0.000000e+00 : f32
    %9 = vector.broadcast %cst_8 : f32 to vector<128x128xf32>
    %10 = arith.maximumf %8, %9 : vector<128x128xf32>
    %11 = arith.truncf %10 : vector<128x128xf32> to vector<128x128xbf16>
    %c0_9 = arith.constant 0 : index
    %c0_10 = arith.constant 0 : index
    %12 = vector.load %arg4[%c0_9, %c0_10] : memref<128x128xbf16, #tpu.memory_space<vmem>>, vector<128x128xbf16>
    %c0_11 = arith.constant 0 : index
    %c0_12 = arith.constant 0 : index
    %13 = vector.load %arg5[%c0_11, %c0_12] : memref<1x128xf32, #tpu.memory_space<vmem>>, vector<1x128xf32>
    %cst_13 = arith.constant dense<0.000000e+00> : vector<128x128xf32>
    %14 = tpu.matmul %0, %11, %cst_13 {dimension_numbers = #tpu.dot_dimension_numbers<[1], [0], [0], [1], [0, 0, 1, 1], [], []>} : vector<128x128xbf16>, vector<128x128xbf16>, vector<128x128xf32> -> vector<128x128xf32>
    %15 = arith.truncf %14 : vector<128x128xf32> to vector<128x128xbf16>
    %cst_14 = arith.constant dense<0.000000e+00> : vector<128x128xf32>
    %16 = tpu.matmul %15, %12, %cst_14 {dimension_numbers = #tpu.dot_dimension_numbers<[1], [0], [0], [1], [0, 0, 1, 1], [], []>} : vector<128x128xbf16>, vector<128x128xbf16>, vector<128x128xf32> -> vector<128x128xf32>
    %17 = vector.broadcast %13 : vector<1x128xf32> to vector<128x128xf32>
    %18 = arith.addf %16, %17 : vector<128x128xf32>
    %cst_15 = arith.constant 0.000000e+00 : f32
    %19 = vector.broadcast %cst_15 : f32 to vector<128x128xf32>
    %20 = arith.maximumf %18, %19 : vector<128x128xf32>
    %21 = arith.truncf %20 : vector<128x128xf32> to vector<128x128xbf16>
    %c0_16 = arith.constant 0 : index
    %c0_17 = arith.constant 0 : index
    %22 = vector.load %arg6[%c0_16, %c0_17] : memref<128x128xbf16, #tpu.memory_space<vmem>>, vector<128x128xbf16>
    %c0_18 = arith.constant 0 : index
    %c0_19 = arith.constant 0 : index
    %23 = vector.load %arg7[%c0_18, %c0_19] : memref<1x128xf32, #tpu.memory_space<vmem>>, vector<1x128xf32>
    %cst_20 = arith.constant dense<0.000000e+00> : vector<128x128xf32>
    %24 = tpu.matmul %21, %22, %cst_20 {dimension_numbers = #tpu.dot_dimension_numbers<[1], [0], [0], [1], [0, 0, 1, 1], [], []>} : vector<128x128xbf16>, vector<128x128xbf16>, vector<128x128xf32> -> vector<128x128xf32>
    %25 = vector.broadcast %23 : vector<1x128xf32> to vector<128x128xf32>
    %26 = arith.addf %24, %25 : vector<128x128xf32>
    %c0_21 = arith.constant 0 : index
    %c0_22 = arith.constant 0 : index
    %27 = vector.load %arg8[%c0_21, %c0_22] : memref<128x128xf32, #tpu.memory_space<vmem>>, vector<128x128xf32>
    tpu.vector_store %arg8[%c0_21, %c0_22], %26 {strides = array<i32>} : memref<128x128xf32, #tpu.memory_space<vmem>>, vector<128x128xf32>,
    return
  }
}

</mosaic_0001>

<llo_original>
// kernel: forward.1
$region0: #{forward.1}
  #allocation0 [shape = 'u32[]', space=smem, size = 0x4, offset = 0x4, fixed_abs, tag = 'smem constant byte address 0x4 - core index']
  #allocation1 [shape = 'u32[144,128]{1,0:T(1,128)}', space=vmem, size = 0x12000, scoped, tag = 'internal scratch']
  %s0 = inlined_call_operand.vmem [shape: bf16[128,128], index: 0, kind: input, shape index: {}]
  %s1 = inlined_call_operand.vmem [shape: bf16[128,128], index: 1, kind: input, shape index: {}]
  %s2 = inlined_call_operand.hbm [shape: bf16[128,128], index: 2, kind: input, shape index: {}]
  %s3 = inlined_call_operand.vmem [shape: f32[1,128], index: 3, kind: input, shape index: {}]
  %s4 = inlined_call_operand.hbm [shape: bf16[128,128], index: 4, kind: input, shape index: {}]
  %s5 = inlined_call_operand.vmem [shape: f32[1,128], index: 5, kind: input, shape index: {}]
  %s6 = inlined_call_operand.hbm [shape: bf16[128,128], index: 6, kind: input, shape index: {}]
  %s7 = inlined_call_operand.vmem [shape: f32[1,128], index: 7, kind: input, shape index: {}]
  %s8 = inlined_call_operand.vmem [shape: f32[128,128], index: 8, kind: output, shape index: {}]
  %s9 = sld [smem:[#allocation0]]
  $region54: #{forward.1} parent=0
    _
  %s11 = ssub.s32 1, %s9
  %s12 = scalar_select 0, %s11, %s9
  $region1: #{forward.1} parent=0
    #allocation2 [shape = 'u8[32768]{0}', space=vmem, size = 0x8000, scoped, tag = 'input window, operand 2, single buffered']
    #allocation3 [shape = 's32[1]{0}', space=sflag, size = 0x4, scoped, tag = 'scoped memory for forward.1']
    #allocation4 [shape = 'u8[32768]{0}', space=vmem, size = 0x8000, scoped, tag = 'input window, operand 4, single buffered']
    #allocation5 [shape = 's32[1]{0}', space=sflag, size = 0x4, scoped, tag = 'scoped memory for forward.1']
    #allocation6 [shape = 'u8[32768]{0}', space=vmem, size = 0x8000, scoped, tag = 'input window, operand 6, single buffered']
    %13 = vsyncpa [#allocation3], 0
    %14 = vsyncpa [#allocation5], 0
    // Predicated region
    $region2: #{forward.1} parent=1 // pred_check
      _
    $region3: #{forward.1} parent=1 // pred_check_branch
      %16 = sbr.rel (0) target = $region5
    $region4: #{forward.1} parent=1 // pred_region
      _
    $region5: #{forward.1} parent=1 // pred_fallthru
      _
    // Predicated region
    $region6: #{forward.1} parent=1 // pred_check
      _
    $region7: #{forward.1} parent=1 // pred_check_branch
      %18 = sbr.rel (0) target = $region9
    $region8: #{forward.1} parent=1 // pred_region
      _
    $region9: #{forward.1} parent=1 // pred_fallthru
      _
    // Predicated region
    $region10: #{forward.1} parent=1 // pred_check
      _
    $region11: #{forward.1} parent=1 // pred_check_branch
      %20 = sbr.rel (0) target = $region13
    $region12: #{forward.1} parent=1 // pred_region
      %s22 = ssub.s32 1024, 1024
      %23 = vsyncadd [#allocation3], %s22
      %s24 = sshll.u32 [#allocation2], 4
      %s25 = int_to_ptr.vmem [resolvable:$true] %s24
      %30 = dma.hbm_to_vmem [thread:$0]  %s2, 1024, %s25, [#allocation3], 64, 64, 4
    $region13: #{forward.1} parent=1 // pred_fallthru
      _
    // Predicated region
    $region14: #{forward.1} parent=1 // pred_check
      _
    $region15: #{forward.1} parent=1 // pred_check_branch
      %32 = sbr.rel (0) target = $region17
    $region16: #{forward.1} parent=1 // pred_region
      _
    $region17: #{forward.1} parent=1 // pred_fallthru
      _
    // Predicated region
    $region18: #{forward.1} parent=1 // pred_check
      _
    $region19: #{forward.1} parent=1 // pred_check_branch
      %34 = sbr.rel (0) target = $region21
    $region20: #{forward.1} parent=1 // pred_region
      %s36 = ssub.s32 1024, 1024
      %37 = vsyncadd [#allocation5], %s36
      %s38 = sshll.u32 [#allocation4], 4
      %s39 = int_to_ptr.vmem [resolvable:$true] %s38
      %44 = dma.hbm_to_vmem [thread:$0]  %s4, 1024, %s39, [#allocation5], 64, 64, 4
    $region21: #{forward.1} parent=1 // pred_fallthru
      _
    // Predicated region
    $region22: #{forward.1} parent=1 // pred_check
      _
    $region23: #{forward.1} parent=1 // pred_check_branch
      %46 = sbr.rel (0) target = $region25
    $region24: #{forward.1} parent=1 // pred_region
      _
    $region25: #{forward.1} parent=1 // pred_fallthru
      _
    // Predicated region
    $region26: #{forward.1} parent=1 // pred_check
      _
    $region27: #{forward.1} parent=1 // pred_check_branch
      %48 = sbr.rel (0) target = $region29
    $region28: #{forward.1} parent=1 // pred_region
      %s50 = ssub.s32 1024, 1024
      %51 = vsyncadd [#allocation5], %s50
      %s52 = sshll.u32 [#allocation6], 4
      %s53 = int_to_ptr.vmem [resolvable:$true] %s52
      %58 = dma.hbm_to_vmem [thread:$0]  %s6, 1024, %s53, [#allocation5], 64, 64, 4
    $region29: #{forward.1} parent=1 // pred_fallthru
      _
    // Predicated region
    $region30: #{forward.1} parent=1 // pred_check
      _
    $region31: #{forward.1} parent=1 // pred_check_branch
      %60 = sbr.rel (0) target = $region33
    $region32: #{forward.1} parent=1 // pred_region
      _
    $region33: #{forward.1} parent=1 // pred_fallthru
      _
    // Predicated region
    $region34: #{forward.1} parent=1 // pred_check
      _
    $region35: #{forward.1} parent=1 // pred_check_branch
      %62 = sbr.rel (0) target = $region37
    $region36: #{forward.1} parent=1 // pred_region
      %63 = dma.done [#allocation3], 1024
    $region37: #{forward.1} parent=1 // pred_fallthru
      _
    // Predicated region
    $region38: #{forward.1} parent=1 // pred_check
      _
    $region39: #{forward.1} parent=1 // pred_check_branch
      %65 = sbr.rel (0) target = $region41
    $region40: #{forward.1} parent=1 // pred_region
      %66 = dma.done [#allocation5], 1024
    $region41: #{forward.1} parent=1 // pred_fallthru
      _
    // Predicated region
    $region42: #{forward.1} parent=1 // pred_check
      _
    $region43: #{forward.1} parent=1 // pred_check_branch
      %68 = sbr.rel (0) target = $region45
    $region44: #{forward.1} parent=1 // pred_region
      %69 = dma.done [#allocation5], 1024
    $region45: #{forward.1} parent=1 // pred_fallthru
      _
    %v71 = vld [vmem:[%s0] sm:$0xf]
    %v72 = vld [vmem:[%s0 + $0x4] sm:$0xf]
    %v73 = vld [vmem:[%s0 + $0x8] sm:$0xf]
    %v74 = vld [vmem:[%s0 + $0xc] sm:$0xf]
    %v75 = vld [vmem:[%s0 + $0x10] sm:$0xf]
    %v76 = vld [vmem:[%s0 + $0x14] sm:$0xf]
    %v77 = vld [vmem:[%s0 + $0x18] sm:$0xf]
    %v78 = vld [vmem:[%s0 + $0x1c] sm:$0xf]
    %v79 = vld [vmem:[%s0 + $0x20] sm:$0xf]
    %v80 = vld [vmem:[%s0 + $0x24] sm:$0xf]
    %v81 = vld [vmem:[%s0 + $0x28] sm:$0xf]
    %v82 = vld [vmem:[%s0 + $0x2c] sm:$0xf]
    %v83 = vld [vmem:[%s0 + $0x30] sm:$0xf]
    %v84 = vld [vmem:[%s0 + $0x34] sm:$0xf]
    %v85 = vld [vmem:[%s0 + $0x38] sm:$0xf]
    %v86 = vld [vmem:[%s0 + $0x3c] sm:$0xf]
    %v87 = vld [vmem:[%s1] sm:$0xf]
    %v88 = vld [vmem:[%s1 + $0x4] sm:$0xf]
    %v89 = vld [vmem:[%s1 + $0x8] sm:$0xf]
    %v90 = vld [vmem:[%s1 + $0xc] sm:$0xf]
    %v91 = vld [vmem:[%s1 + $0x10] sm:$0xf]
    %v92 = vld [vmem:[%s1 + $0x14] sm:$0xf]
    %v93 = vld [vmem:[%s1 + $0x18] sm:$0xf]
    %v94 = vld [vmem:[%s1 + $0x1c] sm:$0xf]
    %v95 = vld [vmem:[%s1 + $0x20] sm:$0xf]
    %v96 = vld [vmem:[%s1 + $0x24] sm:$0xf]
    %v97 = vld [vmem:[%s1 + $0x28] sm:$0xf]
    %v98 = vld [vmem:[%s1 + $0x2c] sm:$0xf]
    %v99 = vld [vmem:[%s1 + $0x30] sm:$0xf]
    %v100 = vld [vmem:[%s1 + $0x34] sm:$0xf]
    %v101 = vld [vmem:[%s1 + $0x38] sm:$0xf]
    %v102 = vld [vmem:[%s1 + $0x3c] sm:$0xf]
    %v103 = vld [vmem:[#allocation2] sm:$0xf]
    %v104 = vld [vmem:[#allocation2 + $0x4] sm:$0xf]
    %v105 = vld [vmem:[#allocation2 + $0x8] sm:$0xf]
    %v106 = vld [vmem:[#allocation2 + $0xc] sm:$0xf]
    %v107 = vld [vmem:[#allocation2 + $0x10] sm:$0xf]
    %v108 = vld [vmem:[#allocation2 + $0x14] sm:$0xf]
    %v109 = vld [vmem:[#allocation2 + $0x18] sm:$0xf]
    %v110 = vld [vmem:[#allocation2 + $0x1c] sm:$0xf]
    %v111 = vld [vmem:[#allocation2 + $0x20] sm:$0xf]
    %v112 = vld [vmem:[#allocation2 + $0x24] sm:$0xf]
    %v113 = vld [vmem:[#allocation2 + $0x28] sm:$0xf]
    %v114 = vld [vmem:[#allocation2 + $0x2c] sm:$0xf]
    %v115 = vld [vmem:[#allocation2 + $0x30] sm:$0xf]
    %v116 = vld [vmem:[#allocation2 + $0x34] sm:$0xf]
    %v117 = vld [vmem:[#allocation2 + $0x38] sm:$0xf]
    %v118 = vld [vmem:[#allocation2 + $0x3c] sm:$0xf]
    %v119 = vld [vmem:[%s3] sm:$0x1]
    %v136 = vunpack.c.l.b16 %v71
    %v137 = vunpack.c.l.b16 %v72
    %v138 = vunpack.c.l.b16 %v73
    %v139 = vunpack.c.l.b16 %v74
    %v140 = vunpack.c.l.b16 %v75
    %v141 = vunpack.c.l.b16 %v76
    %v142 = vunpack.c.l.b16 %v77
    %v143 = vunpack.c.l.b16 %v78
    %v144 = vunpack.c.l.b16 %v79
    %v145 = vunpack.c.l.b16 %v80
    %v146 = vunpack.c.l.b16 %v81
    %v147 = vunpack.c.l.b16 %v82
    %v148 = vunpack.c.l.b16 %v83
    %v149 = vunpack.c.l.b16 %v84
    %v150 = vunpack.c.l.b16 %v85
    %v151 = vunpack.c.l.b16 %v86
    %v152 = vpack.c.b16 %v137, %v136
    %v153 = vpack.c.b16 %v139, %v138
    %v154 = vpack.c.b16 %v141, %v140
    %v155 = vpack.c.b16 %v143, %v142
    %v156 = vpack.c.b16 %v145, %v144
    %v157 = vpack.c.b16 %v147, %v146
    %v158 = vpack.c.b16 %v149, %v148
    %v159 = vpack.c.b16 %v151, %v150
    %v184 = vunpack.c.l.b16 %v87
    %v185 = vunpack.c.l.b16 %v88
    %v186 = vunpack.c.l.b16 %v89
    %v187 = vunpack.c.l.b16 %v90
    %v188 = vunpack.c.l.b16 %v91
    %v189 = vunpack.c.l.b16 %v92
    %v190 = vunpack.c.l.b16 %v93
    %v191 = vunpack.c.l.b16 %v94
    %v192 = vunpack.c.l.b16 %v95
    %v193 = vunpack.c.l.b16 %v96
    %v194 = vunpack.c.l.b16 %v97
    %v195 = vunpack.c.l.b16 %v98
    %v196 = vunpack.c.l.b16 %v99
    %v197 = vunpack.c.l.b16 %v100
    %v198 = vunpack.c.l.b16 %v101
    %v199 = vunpack.c.l.b16 %v102
    %v200 = vpack.c.b16 %v185, %v184
    %v201 = vpack.c.b16 %v187, %v186
    %v202 = vpack.c.b16 %v189, %v188
    %v203 = vpack.c.b16 %v191, %v190
    %v204 = vpack.c.b16 %v193, %v192
    %v205 = vpack.c.b16 %v195, %v194
    %v206 = vpack.c.b16 %v197, %v196
    %v207 = vpack.c.b16 %v199, %v198
    %216 = vmatprep.subr.bf16.mxu0 0
    %217 = vmatpush1.bf16.msra.mxu0 %v200
    %218 = vmatprep.subr.bf16.mxu0 0
    %219 = vmatpush1.bf16.msra.mxu0 %v201
    %220 = vmatprep.subr.bf16.mxu0 0
    %221 = vmatpush1.bf16.msra.mxu0 %v202
    %222 = vmatprep.subr.bf16.mxu0 0
    %223 = vmatpush1.bf16.msra.mxu0 %v203
    %224 = vmatprep.subr.bf16.mxu0 0
    %225 = vmatpush1.bf16.msra.mxu0 %v204
    %226 = vmatprep.subr.bf16.mxu0 0
    %227 = vmatpush1.bf16.msra.mxu0 %v205
    %228 = vmatprep.subr.bf16.mxu0 0
    %229 = vmatpush1.bf16.msra.mxu0 %v206
    %230 = vmatprep.subr.bf16.mxu0 0
    %231 = vmatpush1.bf16.msra.mxu0 %v207
    %232 = vmatprep.subr.bf16.mxu0 0
    %233 = vmatpush1.bf16.msra.mxu0 0
    %234 = vmatprep.subr.bf16.mxu0 0
    %235 = vmatpush1.bf16.msra.mxu0 0
    %236 = vmatprep.subr.bf16.mxu0 0
    %237 = vmatpush1.bf16.msra.mxu0 0
    %238 = vmatprep.subr.bf16.mxu0 0
    %239 = vmatpush1.bf16.msra.mxu0 0
    %240 = vmatprep.subr.bf16.mxu0 0
    %241 = vmatpush1.bf16.msra.mxu0 0
    %242 = vmatprep.subr.bf16.mxu0 0
    %243 = vmatpush1.bf16.msra.mxu0 0
    %244 = vmatprep.subr.bf16.mxu0 0
    %245 = vmatpush1.bf16.msra.mxu0 0
    %246 = vmatprep.subr.bf16.mxu0 0
    %247 = vmatpush1.bf16.msra.mxu0 0
    %248 = vmatprep.mubr.bf16.mxu0 0
    %249 = vmatmul.mubr.bf16.gmra.mrb[0].mxu0 %v152
    %v250 = vpop.f32.mrb[0].mxu0
    %v251 = vadd.f32 0.0, %v250
    %v252 = vpop.f32.mrb[0].mxu0
    %v253 = vpop.f32.mrb[0].mxu0
    %v254 = vadd.f32 0.0, %v253
    %v255 = vpop.f32.mrb[0].mxu0
    %256 = vmatprep.mubr.bf16.mxu0 0
    %257 = vmatmul.mubr.bf16.gmra.mrb[0].mxu0 %v153
    %v258 = vpop.f32.mrb[0].mxu0
    %v259 = vadd.f32 0.0, %v258
    %v260 = vpop.f32.mrb[0].mxu0
    %v261 = vpop.f32.mrb[0].mxu0
    %v262 = vadd.f32 0.0, %v261
    %v263 = vpop.f32.mrb[0].mxu0
    %264 = vmatprep.mubr.bf16.mxu0 0
    %265 = vmatmul.mubr.bf16.gmra.mrb[0].mxu0 %v154
    %v266 = vpop.f32.mrb[0].mxu0
    %v267 = vadd.f32 0.0, %v266
    %v268 = vpop.f32.mrb[0].mxu0
    %v269 = vpop.f32.mrb[0].mxu0
    %v270 = vadd.f32 0.0, %v269
    %v271 = vpop.f32.mrb[0].mxu0
    %272 = vmatprep.mubr.bf16.mxu0 0
    %273 = vmatmul.mubr.bf16.gmra.mrb[0].mxu0 %v155
    %v274 = vpop.f32.mrb[0].mxu0
    %v275 = vadd.f32 0.0, %v274
    %v276 = vpop.f32.mrb[0].mxu0
    %v277 = vpop.f32.mrb[0].mxu0
    %v278 = vadd.f32 0.0, %v277
    %v279 = vpop.f32.mrb[0].mxu0
    %280 = vmatprep.mubr.bf16.mxu0 0
    %281 = vmatmul.mubr.bf16.gmra.mrb[0].mxu0 %v156
    %v282 = vpop.f32.mrb[0].mxu0
    %v283 = vadd.f32 0.0, %v282
    %v284 = vpop.f32.mrb[0].mxu0
    %v285 = vpop.f32.mrb[0].mxu0
    %v286 = vadd.f32 0.0, %v285
    %v287 = vpop.f32.mrb[0].mxu0
    %288 = vmatprep.mubr.bf16.mxu0 0
    %289 = vmatmul.mubr.bf16.gmra.mrb[0].mxu0 %v157
    %v290 = vpop.f32.mrb[0].mxu0
    %v291 = vadd.f32 0.0, %v290
    %v292 = vpop.f32.mrb[0].mxu0
    %v293 = vpop.f32.mrb[0].mxu0
    %v294 = vadd.f32 0.0, %v293
    %v295 = vpop.f32.mrb[0].mxu0
    %296 = vmatprep.mubr.bf16.mxu0 0
    %297 = vmatmul.mubr.bf16.gmra.mrb[0].mxu0 %v158
    %v298 = vpop.f32.mrb[0].mxu0
    %v299 = vadd.f32 0.0, %v298
    %v300 = vpop.f32.mrb[0].mxu0
    %v301 = vpop.f32.mrb[0].mxu0
    %v302 = vadd.f32 0.0, %v301
    %v303 = vpop.f32.mrb[0].mxu0
    %304 = vmatprep.mubr.bf16.mxu0 0
    %305 = vmatmul.mubr.bf16.gmra.mrb[0].mxu0 %v159
    %v306 = vpop.f32.mrb[0].mxu0
    %v307 = vadd.f32 0.0, %v306
    %v308 = vpop.f32.mrb[0].mxu0
    %v309 = vpop.f32.mrb[0].mxu0
    %v310 = vadd.f32 0.0, %v309
    %v311 = vpop.f32.mrb[0].mxu0
    %312 = vdwg.mxu0
    %v313 = vpack.c.bf16 %v254, %v251
    %v314 = vpack.c.bf16 %v262, %v259
    %v315 = vpack.c.bf16 %v270, %v267
    %v316 = vpack.c.bf16 %v278, %v275
    %v317 = vpack.c.bf16 %v286, %v283
    %v318 = vpack.c.bf16 %v294, %v291
    %v319 = vpack.c.bf16 %v302, %v299
    %v320 = vpack.c.bf16 %v310, %v307
    %v322 = vlaneseq
    %v323 = vshrl.u32 %v322, 7
    %v324 = vsub.s32 0, %v323
    %v325 = vrot.slane %v119, %v324
    %v343 = vunpack.c.l.b16 %v103
    %v344 = vunpack.c.l.b16 %v104
    %v345 = vunpack.c.l.b16 %v105
    %v346 = vunpack.c.l.b16 %v106
    %v347 = vunpack.c.l.b16 %v107
    %v348 = vunpack.c.l.b16 %v108
    %v349 = vunpack.c.l.b16 %v109
    %v350 = vunpack.c.l.b16 %v110
    %v351 = vunpack.c.l.b16 %v111
    %v352 = vunpack.c.l.b16 %v112
    %v353 = vunpack.c.l.b16 %v113
    %v354 = vunpack.c.l.b16 %v114
    %v355 = vunpack.c.l.b16 %v115
    %v356 = vunpack.c.l.b16 %v116
    %v357 = vunpack.c.l.b16 %v117
    %v358 = vunpack.c.l.b16 %v118
    %v359 = vpack.c.b16 %v344, %v343
    %v360 = vpack.c.b16 %v346, %v345
    %v361 = vpack.c.b16 %v348, %v347
    %v362 = vpack.c.b16 %v350, %v349
    %v363 = vpack.c.b16 %v352, %v351
    %v364 = vpack.c.b16 %v354, %v353
    %v365 = vpack.c.b16 %v356, %v355
    %v366 = vpack.c.b16 %v358, %v357
    %375 = vmatprep.subr.bf16.mxu0 0
    %376 = vmatpush1.bf16.msra.mxu0 %v359
    %377 = vmatprep.subr.bf16.mxu0 0
    %378 = vmatpush1.bf16.msra.mxu0 %v360
    %379 = vmatprep.subr.bf16.mxu0 0
    %380 = vmatpush1.bf16.msra.mxu0 %v361
    %381 = vmatprep.subr.bf16.mxu0 0
    %382 = vmatpush1.bf16.msra.mxu0 %v362
    %383 = vmatprep.subr.bf16.mxu0 0
    %384 = vmatpush1.bf16.msra.mxu0 %v363
    %385 = vmatprep.subr.bf16.mxu0 0
    %386 = vmatpush1.bf16.msra.mxu0 %v364
    %387 = vmatprep.subr.bf16.mxu0 0
    %388 = vmatpush1.bf16.msra.mxu0 %v365
    %389 = vmatprep.subr.bf16.mxu0 0
    %390 = vmatpush1.bf16.msra.mxu0 %v366
    %391 = vmatprep.subr.bf16.mxu0 0
    %392 = vmatpush1.bf16.msra.mxu0 0
    %393 = vmatprep.subr.bf16.mxu0 0
    %394 = vmatpush1.bf16.msra.mxu0 0
    %395 = vmatprep.subr.bf16.mxu0 0
    %396 = vmatpush1.bf16.msra.mxu0 0
    %397 = vmatprep.subr.bf16.mxu0 0
    %398 = vmatpush1.bf16.msra.mxu0 0
    %399 = vmatprep.subr.bf16.mxu0 0
    %400 = vmatpush1.bf16.msra.mxu0 0
    %401 = vmatprep.subr.bf16.mxu0 0
    %402 = vmatpush1.bf16.msra.mxu0 0
    %403 = vmatprep.subr.bf16.mxu0 0
    %404 = vmatpush1.bf16.msra.mxu0 0
    %405 = vmatprep.subr.bf16.mxu0 0
    %406 = vmatpush1.bf16.msra.mxu0 0
    %407 = vmatprep.mubr.bf16.mxu0 0
    %408 = vmatmul.mubr.bf16.gmra.mrb[0].mxu0 %v313
    %v409 = vpop.f32.mrb[0].mxu0
    %v410 = vadd.f32 %v325, %v409
    %v411 = vpop.f32.mrb[0].mxu0
    %v412 = vpop.f32.mrb[0].mxu0
    %v413 = vadd.f32 %v325, %v412
    %v414 = vpop.f32.mrb[0].mxu0
    %415 = vmatprep.mubr.bf16.mxu0 0
    %416 = vmatmul.mubr.bf16.gmra.mrb[0].mxu0 %v314
    %v417 = vpop.f32.mrb[0].mxu0
    %v418 = vadd.f32 %v325, %v417
    %v419 = vpop.f32.mrb[0].mxu0
    %v420 = vpop.f32.mrb[0].mxu0
    %v421 = vadd.f32 %v325, %v420
    %v422 = vpop.f32.mrb[0].mxu0
    %423 = vmatprep.mubr.bf16.mxu0 0
    %424 = vmatmul.mubr.bf16.gmra.mrb[0].mxu0 %v315
    %v425 = vpop.f32.mrb[0].mxu0
    %v426 = vadd.f32 %v325, %v425
    %v427 = vpop.f32.mrb[0].mxu0
    %v428 = vpop.f32.mrb[0].mxu0
    %v429 = vadd.f32 %v325, %v428
    %v430 = vpop.f32.mrb[0].mxu0
    %431 = vmatprep.mubr.bf16.mxu0 0
    %432 = vmatmul.mubr.bf16.gmra.mrb[0].mxu0 %v316
    %v433 = vpop.f32.mrb[0].mxu0
    %v434 = vadd.f32 %v325, %v433
    %v435 = vpop.f32.mrb[0].mxu0
    %v436 = vpop.f32.mrb[0].mxu0
    %v437 = vadd.f32 %v325, %v436
    %v438 = vpop.f32.mrb[0].mxu0
    %439 = vmatprep.mubr.bf16.mxu0 0
    %440 = vmatmul.mubr.bf16.gmra.mrb[0].mxu0 %v317
    %v441 = vpop.f32.mrb[0].mxu0
    %v442 = vadd.f32 %v325, %v441
    %v443 = vpop.f32.mrb[0].mxu0
    %v444 = vpop.f32.mrb[0].mxu0
    %v445 = vadd.f32 %v325, %v444
    %v446 = vpop.f32.mrb[0].mxu0
    %447 = vmatprep.mubr.bf16.mxu0 0
    %448 = vmatmul.mubr.bf16.gmra.mrb[0].mxu0 %v318
    %v449 = vpop.f32.mrb[0].mxu0
    %v450 = vadd.f32 %v325, %v449
    %v451 = vpop.f32.mrb[0].mxu0
    %v452 = vpop.f32.mrb[0].mxu0
    %v453 = vadd.f32 %v325, %v452
    %v454 = vpop.f32.mrb[0].mxu0
    %455 = vmatprep.mubr.bf16.mxu0 0
    %456 = vmatmul.mubr.bf16.gmra.mrb[0].mxu0 %v319
    %v457 = vpop.f32.mrb[0].mxu0
    %v458 = vadd.f32 %v325, %v457
    %v459 = vpop.f32.mrb[0].mxu0
    %v460 = vpop.f32.mrb[0].mxu0
    %v461 = vadd.f32 %v325, %v460
    %v462 = vpop.f32.mrb[0].mxu0
    %463 = vmatprep.mubr.bf16.mxu0 0
    %464 = vmatmul.mubr.bf16.gmra.mrb[0].mxu0 %v320
    %v465 = vpop.f32.mrb[0].mxu0
    %v466 = vadd.f32 %v325, %v465
    %v467 = vpop.f32.mrb[0].mxu0
    %v468 = vpop.f32.mrb[0].mxu0
    %v469 = vadd.f32 %v325, %v468
    %v470 = vpop.f32.mrb[0].mxu0
    %471 = vdwg.mxu0
    %v472 = vmax.f32 %v410, 0.0
    %v473 = vmax.f32 %v413, 0.0
    %v474 = vmax.f32 %v418, 0.0
    %v475 = vmax.f32 %v421, 0.0
    %v476 = vmax.f32 %v426, 0.0
    %v477 = vmax.f32 %v429, 0.0
    %v478 = vmax.f32 %v434, 0.0
    %v479 = vmax.f32 %v437, 0.0
    %v480 = vmax.f32 %v442, 0.0
    %v481 = vmax.f32 %v445, 0.0
    %v482 = vmax.f32 %v450, 0.0
    %v483 = vmax.f32 %v453, 0.0
    %v484 = vmax.f32 %v458, 0.0
    %v485 = vmax.f32 %v461, 0.0
    %v486 = vmax.f32 %v466, 0.0
    %v487 = vmax.f32 %v469, 0.0
    %v488 = vpack.c.bf16 %v473, %v472
    %v489 = vpack.c.bf16 %v475, %v474
    %v490 = vpack.c.bf16 %v477, %v476
    %v491 = vpack.c.bf16 %v479, %v478
    %v492 = vpack.c.bf16 %v481, %v480
    %v493 = vpack.c.bf16 %v483, %v482
    %v494 = vpack.c.bf16 %v485, %v484
    %v495 = vpack.c.bf16 %v487, %v486
    %v496 = vld [vmem:[#allocation4] sm:$0xf]
    %v497 = vld [vmem:[#allocation4 + $0x4] sm:$0xf]
    %v498 = vld [vmem:[#allocation4 + $0x8] sm:$0xf]
    %v499 = vld [vmem:[#allocation4 + $0xc] sm:$0xf]
    %v500 = vld [vmem:[#allocation4 + $0x10] sm:$0xf]
    %v501 = vld [vmem:[#allocation4 + $0x14] sm:$0xf]
    %v502 = vld [vmem:[#allocation4 + $0x18] sm:$0xf]
    %v503 = vld [vmem:[#allocation4 + $0x1c] sm:$0xf]
    %v504 = vld [vmem:[#allocation4 + $0x20] sm:$0xf]
    %v505 = vld [vmem:[#allocation4 + $0x24] sm:$0xf]
    %v506 = vld [vmem:[#allocation4 + $0x28] sm:$0xf]
    %v507 = vld [vmem:[#allocation4 + $0x2c] sm:$0xf]
    %v508 = vld [vmem:[#allocation4 + $0x30] sm:$0xf]
    %v509 = vld [vmem:[#allocation4 + $0x34] sm:$0xf]
    %v510 = vld [vmem:[#allocation4 + $0x38] sm:$0xf]
    %v511 = vld [vmem:[#allocation4 + $0x3c] sm:$0xf]
    %v512 = vld [vmem:[%s5] sm:$0x1]
    %513 = vmatprep.subr.bf16.mxu0 0
    %514 = vmatpush1.bf16.msra.mxu0 %v488
    %515 = vmatprep.subr.bf16.mxu0 0
    %516 = vmatpush1.bf16.msra.mxu0 %v489
    %517 = vmatprep.subr.bf16.mxu0 0
    %518 = vmatpush1.bf16.msra.mxu0 %v490
    %519 = vmatprep.subr.bf16.mxu0 0
    %520 = vmatpush1.bf16.msra.mxu0 %v491
    %521 = vmatprep.subr.bf16.mxu0 0
    %522 = vmatpush1.bf16.msra.mxu0 %v492
    %523 = vmatprep.subr.bf16.mxu0 0
    %524 = vmatpush1.bf16.msra.mxu0 %v493
    %525 = vmatprep.subr.bf16.mxu0 0
    %526 = vmatpush1.bf16.msra.mxu0 %v494
    %527 = vmatprep.subr.bf16.mxu0 0
    %528 = vmatpush1.bf16.msra.mxu0 %v495
    %529 = vmatprep.subr.bf16.mxu0 0
    %530 = vmatpush1.bf16.msra.mxu0 0
    %531 = vmatprep.subr.bf16.mxu0 0
    %532 = vmatpush1.bf16.msra.mxu0 0
    %533 = vmatprep.subr.bf16.mxu0 0
    %534 = vmatpush1.bf16.msra.mxu0 0
    %535 = vmatprep.subr.bf16.mxu0 0
    %536 = vmatpush1.bf16.msra.mxu0 0
    %537 = vmatprep.subr.bf16.mxu0 0
    %538 = vmatpush1.bf16.msra.mxu0 0
    %539 = vmatprep.subr.bf16.mxu0 0
    %540 = vmatpush1.bf16.msra.mxu0 0
    %541 = vmatprep.subr.bf16.mxu0 0
    %542 = vmatpush1.bf16.msra.mxu0 0
    %543 = vmatprep.subr.bf16.mxu0 0
    %544 = vmatpush1.bf16.msra.mxu0 0
    %545 = vmatprep.mubr.bf16.mxu0 0
    %546 = vmatmul.mubr.bf16.gmra.mrb[0].mxu0 %v152
    %v547 = vpop.f32.mrb[0].mxu0
    %v548 = vadd.f32 0.0, %v547
    %v549 = vpop.f32.mrb[0].mxu0
    %v550 = vpop.f32.mrb[0].mxu0
    %v551 = vadd.f32 0.0, %v550
    %v552 = vpop.f32.mrb[0].mxu0
    %553 = vmatprep.mubr.bf16.mxu0 0
    %554 = vmatmul.mubr.bf16.gmra.mrb[0].mxu0 %v153
    %v555 = vpop.f32.mrb[0].mxu0
    %v556 = vadd.f32 0.0, %v555
    %v557 = vpop.f32.mrb[0].mxu0
    %v558 = vpop.f32.mrb[0].mxu0
    %v559 = vadd.f32 0.0, %v558
    %v560 = vpop.f32.mrb[0].mxu0
    %561 = vmatprep.mubr.bf16.mxu0 0
    %562 = vmatmul.mubr.bf16.gmra.mrb[0].mxu0 %v154
    %v563 = vpop.f32.mrb[0].mxu0
    %v564 = vadd.f32 0.0, %v563
    %v565 = vpop.f32.mrb[0].mxu0
    %v566 = vpop.f32.mrb[0].mxu0
    %v567 = vadd.f32 0.0, %v566
    %v568 = vpop.f32.mrb[0].mxu0
    %569 = vmatprep.mubr.bf16.mxu0 0
    %570 = vmatmul.mubr.bf16.gmra.mrb[0].mxu0 %v155
    %v571 = vpop.f32.mrb[0].mxu0
    %v572 = vadd.f32 0.0, %v571
    %v573 = vpop.f32.mrb[0].mxu0
    %v574 = vpop.f32.mrb[0].mxu0
    %v575 = vadd.f32 0.0, %v574
    %v576 = vpop.f32.mrb[0].mxu0
    %577 = vmatprep.mubr.bf16.mxu0 0
    %578 = vmatmul.mubr.bf16.gmra.mrb[0].mxu0 %v156
    %v579 = vpop.f32.mrb[0].mxu0
    %v580 = vadd.f32 0.0, %v579
    %v581 = vpop.f32.mrb[0].mxu0
    %v582 = vpop.f32.mrb[0].mxu0
    %v583 = vadd.f32 0.0, %v582
    %v584 = vpop.f32.mrb[0].mxu0
    %585 = vmatprep.mubr.bf16.mxu0 0
    %586 = vmatmul.mubr.bf16.gmra.mrb[0].mxu0 %v157
    %v587 = vpop.f32.mrb[0].mxu0
    %v588 = vadd.f32 0.0, %v587
    %v589 = vpop.f32.mrb[0].mxu0
    %v590 = vpop.f32.mrb[0].mxu0
    %v591 = vadd.f32 0.0, %v590
    %v592 = vpop.f32.mrb[0].mxu0
    %593 = vmatprep.mubr.bf16.mxu0 0
    %594 = vmatmul.mubr.bf16.gmra.mrb[0].mxu0 %v158
    %v595 = vpop.f32.mrb[0].mxu0
    %v596 = vadd.f32 0.0, %v595
    %v597 = vpop.f32.mrb[0].mxu0
    %v598 = vpop.f32.mrb[0].mxu0
    %v599 = vadd.f32 0.0, %v598
    %v600 = vpop.f32.mrb[0].mxu0
    %601 = vmatprep.mubr.bf16.mxu0 0
    %602 = vmatmul.mubr.bf16.gmra.mrb[0].mxu0 %v159
    %v603 = vpop.f32.mrb[0].mxu0
    %v604 = vadd.f32 0.0, %v603
    %v605 = vpop.f32.mrb[0].mxu0
    %v606 = vpop.f32.mrb[0].mxu0
    %v607 = vadd.f32 0.0, %v606
    %v608 = vpop.f32.mrb[0].mxu0
    %609 = vdwg.mxu0
    %v610 = vpack.c.bf16 %v551, %v548
    %v611 = vpack.c.bf16 %v559, %v556
    %v612 = vpack.c.bf16 %v567, %v564
    %v613 = vpack.c.bf16 %v575, %v572
    %v614 = vpack.c.bf16 %v583, %v580
    %v615 = vpack.c.bf16 %v591, %v588
    %v616 = vpack.c.bf16 %v599, %v596
    %v617 = vpack.c.bf16 %v607, %v604
    %v619 = vlaneseq
    %v620 = vshrl.u32 %v619, 7
    %v621 = vsub.s32 0, %v620
    %v622 = vrot.slane %v512, %v621
    %v640 = vunpack.c.l.b16 %v496
    %v641 = vunpack.c.l.b16 %v497
    %v642 = vunpack.c.l.b16 %v498
    %v643 = vunpack.c.l.b16 %v499
    %v644 = vunpack.c.l.b16 %v500
    %v645 = vunpack.c.l.b16 %v501
    %v646 = vunpack.c.l.b16 %v502
    %v647 = vunpack.c.l.b16 %v503
    %v648 = vunpack.c.l.b16 %v504
    %v649 = vunpack.c.l.b16 %v505
    %v650 = vunpack.c.l.b16 %v506
    %v651 = vunpack.c.l.b16 %v507
    %v652 = vunpack.c.l.b16 %v508
    %v653 = vunpack.c.l.b16 %v509
    %v654 = vunpack.c.l.b16 %v510
    %v655 = vunpack.c.l.b16 %v511
    %v656 = vpack.c.b16 %v641, %v640
    %v657 = vpack.c.b16 %v643, %v642
    %v658 = vpack.c.b16 %v645, %v644
    %v659 = vpack.c.b16 %v647, %v646
    %v660 = vpack.c.b16 %v649, %v648
    %v661 = vpack.c.b16 %v651, %v650
    %v662 = vpack.c.b16 %v653, %v652
    %v663 = vpack.c.b16 %v655, %v654
    %672 = vmatprep.subr.bf16.mxu0 0
    %673 = vmatpush1.bf16.msra.mxu0 %v656
    %674 = vmatprep.subr.bf16.mxu0 0
    %675 = vmatpush1.bf16.msra.mxu0 %v657
    %676 = vmatprep.subr.bf16.mxu0 0
    %677 = vmatpush1.bf16.msra.mxu0 %v658
    %678 = vmatprep.subr.bf16.mxu0 0
    %679 = vmatpush1.bf16.msra.mxu0 %v659
    %680 = vmatprep.subr.bf16.mxu0 0
    %681 = vmatpush1.bf16.msra.mxu0 %v660
    %682 = vmatprep.subr.bf16.mxu0 0
    %683 = vmatpush1.bf16.msra.mxu0 %v661
    %684 = vmatprep.subr.bf16.mxu0 0
    %685 = vmatpush1.bf16.msra.mxu0 %v662
    %686 = vmatprep.subr.bf16.mxu0 0
    %687 = vmatpush1.bf16.msra.mxu0 %v663
    %688 = vmatprep.subr.bf16.mxu0 0
    %689 = vmatpush1.bf16.msra.mxu0 0
    %690 = vmatprep.subr.bf16.mxu0 0
    %691 = vmatpush1.bf16.msra.mxu0 0
    %692 = vmatprep.subr.bf16.mxu0 0
    %693 = vmatpush1.bf16.msra.mxu0 0
    %694 = vmatprep.subr.bf16.mxu0 0
    %695 = vmatpush1.bf16.msra.mxu0 0
    %696 = vmatprep.subr.bf16.mxu0 0
    %697 = vmatpush1.bf16.msra.mxu0 0
    %698 = vmatprep.subr.bf16.mxu0 0
    %699 = vmatpush1.bf16.msra.mxu0 0
    %700 = vmatprep.subr.bf16.mxu0 0
    %701 = vmatpush1.bf16.msra.mxu0 0
    %702 = vmatprep.subr.bf16.mxu0 0
    %703 = vmatpush1.bf16.msra.mxu0 0
    %704 = vmatprep.mubr.bf16.mxu0 0
    %705 = vmatmul.mubr.bf16.gmra.mrb[0].mxu0 %v610
    %v706 = vpop.f32.mrb[0].mxu0
    %v707 = vadd.f32 %v622, %v706
    %v708 = vpop.f32.mrb[0].mxu0
    %v709 = vpop.f32.mrb[0].mxu0
    %v710 = vadd.f32 %v622, %v709
    %v711 = vpop.f32.mrb[0].mxu0
    %712 = vmatprep.mubr.bf16.mxu0 0
    %713 = vmatmul.mubr.bf16.gmra.mrb[0].mxu0 %v611
    %v714 = vpop.f32.mrb[0].mxu0
    %v715 = vadd.f32 %v622, %v714
    %v716 = vpop.f32.mrb[0].mxu0
    %v717 = vpop.f32.mrb[0].mxu0
    %v718 = vadd.f32 %v622, %v717
    %v719 = vpop.f32.mrb[0].mxu0
    %720 = vmatprep.mubr.bf16.mxu0 0
    %721 = vmatmul.mubr.bf16.gmra.mrb[0].mxu0 %v612
    %v722 = vpop.f32.mrb[0].mxu0
    %v723 = vadd.f32 %v622, %v722
    %v724 = vpop.f32.mrb[0].mxu0
    %v725 = vpop.f32.mrb[0].mxu0
    %v726 = vadd.f32 %v622, %v725
    %v727 = vpop.f32.mrb[0].mxu0
    %728 = vmatprep.mubr.bf16.mxu0 0
    %729 = vmatmul.mubr.bf16.gmra.mrb[0].mxu0 %v613
    %v730 = vpop.f32.mrb[0].mxu0
    %v731 = vadd.f32 %v622, %v730
    %v732 = vpop.f32.mrb[0].mxu0
    %v733 = vpop.f32.mrb[0].mxu0
    %v734 = vadd.f32 %v622, %v733
    %v735 = vpop.f32.mrb[0].mxu0
    %736 = vmatprep.mubr.bf16.mxu0 0
    %737 = vmatmul.mubr.bf16.gmra.mrb[0].mxu0 %v614
    %v738 = vpop.f32.mrb[0].mxu0
    %v739 = vadd.f32 %v622, %v738
    %v740 = vpop.f32.mrb[0].mxu0
    %v741 = vpop.f32.mrb[0].mxu0
    %v742 = vadd.f32 %v622, %v741
    %v743 = vpop.f32.mrb[0].mxu0
    %744 = vmatprep.mubr.bf16.mxu0 0
    %745 = vmatmul.mubr.bf16.gmra.mrb[0].mxu0 %v615
    %v746 = vpop.f32.mrb[0].mxu0
    %v747 = vadd.f32 %v622, %v746
    %v748 = vpop.f32.mrb[0].mxu0
    %v749 = vpop.f32.mrb[0].mxu0
    %v750 = vadd.f32 %v622, %v749
    %v751 = vpop.f32.mrb[0].mxu0
    %752 = vmatprep.mubr.bf16.mxu0 0
    %753 = vmatmul.mubr.bf16.gmra.mrb[0].mxu0 %v616
    %v754 = vpop.f32.mrb[0].mxu0
    %v755 = vadd.f32 %v622, %v754
    %v756 = vpop.f32.mrb[0].mxu0
    %v757 = vpop.f32.mrb[0].mxu0
    %v758 = vadd.f32 %v622, %v757
    %v759 = vpop.f32.mrb[0].mxu0
    %760 = vmatprep.mubr.bf16.mxu0 0
    %761 = vmatmul.mubr.bf16.gmra.mrb[0].mxu0 %v617
    %v762 = vpop.f32.mrb[0].mxu0
    %v763 = vadd.f32 %v622, %v762
    %v764 = vpop.f32.mrb[0].mxu0
    %v765 = vpop.f32.mrb[0].mxu0
    %v766 = vadd.f32 %v622, %v765
    %v767 = vpop.f32.mrb[0].mxu0
    %768 = vdwg.mxu0
    %v769 = vmax.f32 %v707, 0.0
    %v770 = vmax.f32 %v710, 0.0
    %v771 = vmax.f32 %v715, 0.0
    %v772 = vmax.f32 %v718, 0.0
    %v773 = vmax.f32 %v723, 0.0
    %v774 = vmax.f32 %v726, 0.0
    %v775 = vmax.f32 %v731, 0.0
    %v776 = vmax.f32 %v734, 0.0
    %v777 = vmax.f32 %v739, 0.0
    %v778 = vmax.f32 %v742, 0.0
    %v779 = vmax.f32 %v747, 0.0
    %v780 = vmax.f32 %v750, 0.0
    %v781 = vmax.f32 %v755, 0.0
    %v782 = vmax.f32 %v758, 0.0
    %v783 = vmax.f32 %v763, 0.0
    %v784 = vmax.f32 %v766, 0.0
    %v785 = vpack.c.bf16 %v770, %v769
    %v786 = vpack.c.bf16 %v772, %v771
    %v787 = vpack.c.bf16 %v774, %v773
    %v788 = vpack.c.bf16 %v776, %v775
    %v789 = vpack.c.bf16 %v778, %v777
    %v790 = vpack.c.bf16 %v780, %v779
    %v791 = vpack.c.bf16 %v782, %v781
    %v792 = vpack.c.bf16 %v784, %v783
    %v793 = vld [vmem:[#allocation6] sm:$0xf]
    %v794 = vld [vmem:[#allocation6 + $0x4] sm:$0xf]
    %v795 = vld [vmem:[#allocation6 + $0x8] sm:$0xf]
    %v796 = vld [vmem:[#allocation6 + $0xc] sm:$0xf]
    %v797 = vld [vmem:[#allocation6 + $0x10] sm:$0xf]
    %v798 = vld [vmem:[#allocation6 + $0x14] sm:$0xf]
    %v799 = vld [vmem:[#allocation6 + $0x18] sm:$0xf]
    %v800 = vld [vmem:[#allocation6 + $0x1c] sm:$0xf]
    %v801 = vld [vmem:[#allocation6 + $0x20] sm:$0xf]
    %v802 = vld [vmem:[#allocation6 + $0x24] sm:$0xf]
    %v803 = vld [vmem:[#allocation6 + $0x28] sm:$0xf]
    %v804 = vld [vmem:[#allocation6 + $0x2c] sm:$0xf]
    %v805 = vld [vmem:[#allocation6 + $0x30] sm:$0xf]
    %v806 = vld [vmem:[#allocation6 + $0x34] sm:$0xf]
    %v807 = vld [vmem:[#allocation6 + $0x38] sm:$0xf]
    %v808 = vld [vmem:[#allocation6 + $0x3c] sm:$0xf]
    %v809 = vld [vmem:[%s7] sm:$0x1]
    %v811 = vlaneseq
    %v812 = vshrl.u32 %v811, 7
    %v813 = vsub.s32 0, %v812
    %v814 = vrot.slane %v809, %v813
    %v832 = vunpack.c.l.b16 %v793
    %v833 = vunpack.c.l.b16 %v794
    %v834 = vunpack.c.l.b16 %v795
    %v835 = vunpack.c.l.b16 %v796
    %v836 = vunpack.c.l.b16 %v797
    %v837 = vunpack.c.l.b16 %v798
    %v838 = vunpack.c.l.b16 %v799
    %v839 = vunpack.c.l.b16 %v800
    %v840 = vunpack.c.l.b16 %v801
    %v841 = vunpack.c.l.b16 %v802
    %v842 = vunpack.c.l.b16 %v803
    %v843 = vunpack.c.l.b16 %v804
    %v844 = vunpack.c.l.b16 %v805
    %v845 = vunpack.c.l.b16 %v806
    %v846 = vunpack.c.l.b16 %v807
    %v847 = vunpack.c.l.b16 %v808
    %v848 = vpack.c.b16 %v833, %v832
    %v849 = vpack.c.b16 %v835, %v834
    %v850 = vpack.c.b16 %v837, %v836
    %v851 = vpack.c.b16 %v839, %v838
    %v852 = vpack.c.b16 %v841, %v840
    %v853 = vpack.c.b16 %v843, %v842
    %v854 = vpack.c.b16 %v845, %v844
    %v855 = vpack.c.b16 %v847, %v846
    %864 = vmatprep.subr.bf16.mxu0 0
    %865 = vmatpush1.bf16.msra.mxu0 %v848
    %866 = vmatprep.subr.bf16.mxu0 0
    %867 = vmatpush1.bf16.msra.mxu0 %v849
    %868 = vmatprep.subr.bf16.mxu0 0
    %869 = vmatpush1.bf16.msra.mxu0 %v850
    %870 = vmatprep.subr.bf16.mxu0 0
    %871 = vmatpush1.bf16.msra.mxu0 %v851
    %872 = vmatprep.subr.bf16.mxu0 0
    %873 = vmatpush1.bf16.msra.mxu0 %v852
    %874 = vmatprep.subr.bf16.mxu0 0
    %875 = vmatpush1.bf16.msra.mxu0 %v853
    %876 = vmatprep.subr.bf16.mxu0 0
    %877 = vmatpush1.bf16.msra.mxu0 %v854
    %878 = vmatprep.subr.bf16.mxu0 0
    %879 = vmatpush1.bf16.msra.mxu0 %v855
    %880 = vmatprep.subr.bf16.mxu0 0
    %881 = vmatpush1.bf16.msra.mxu0 0
    %882 = vmatprep.subr.bf16.mxu0 0
    %883 = vmatpush1.bf16.msra.mxu0 0
    %884 = vmatprep.subr.bf16.mxu0 0
    %885 = vmatpush1.bf16.msra.mxu0 0
    %886 = vmatprep.subr.bf16.mxu0 0
    %887 = vmatpush1.bf16.msra.mxu0 0
    %888 = vmatprep.subr.bf16.mxu0 0
    %889 = vmatpush1.bf16.msra.mxu0 0
    %890 = vmatprep.subr.bf16.mxu0 0
    %891 = vmatpush1.bf16.msra.mxu0 0
    %892 = vmatprep.subr.bf16.mxu0 0
    %893 = vmatpush1.bf16.msra.mxu0 0
    %894 = vmatprep.subr.bf16.mxu0 0
    %895 = vmatpush1.bf16.msra.mxu0 0
    %896 = vmatprep.mubr.bf16.mxu0 0
    %897 = vmatmul.mubr.bf16.gmra.mrb[0].mxu0 %v785
    %v898 = vpop.f32.mrb[0].mxu0
    %v899 = vadd.f32 %v814, %v898
    %v900 = vpop.f32.mrb[0].mxu0
    %v901 = vpop.f32.mrb[0].mxu0
    %v902 = vadd.f32 %v814, %v901
    %v903 = vpop.f32.mrb[0].mxu0
    %904 = vmatprep.mubr.bf16.mxu0 0
    %905 = vmatmul.mubr.bf16.gmra.mrb[0].mxu0 %v786
    %v906 = vpop.f32.mrb[0].mxu0
    %v907 = vadd.f32 %v814, %v906
    %v908 = vpop.f32.mrb[0].mxu0
    %v909 = vpop.f32.mrb[0].mxu0
    %v910 = vadd.f32 %v814, %v909
    %v911 = vpop.f32.mrb[0].mxu0
    %912 = vmatprep.mubr.bf16.mxu0 0
    %913 = vmatmul.mubr.bf16.gmra.mrb[0].mxu0 %v787
    %v914 = vpop.f32.mrb[0].mxu0
    %v915 = vadd.f32 %v814, %v914
    %v916 = vpop.f32.mrb[0].mxu0
    %v917 = vpop.f32.mrb[0].mxu0
    %v918 = vadd.f32 %v814, %v917
    %v919 = vpop.f32.mrb[0].mxu0
    %920 = vmatprep.mubr.bf16.mxu0 0
    %921 = vmatmul.mubr.bf16.gmra.mrb[0].mxu0 %v788
    %v922 = vpop.f32.mrb[0].mxu0
    %v923 = vadd.f32 %v814, %v922
    %v924 = vpop.f32.mrb[0].mxu0
    %v925 = vpop.f32.mrb[0].mxu0
    %v926 = vadd.f32 %v814, %v925
    %v927 = vpop.f32.mrb[0].mxu0
    %928 = vmatprep.mubr.bf16.mxu0 0
    %929 = vmatmul.mubr.bf16.gmra.mrb[0].mxu0 %v789
    %v930 = vpop.f32.mrb[0].mxu0
    %v931 = vadd.f32 %v814, %v930
    %v932 = vpop.f32.mrb[0].mxu0
    %v933 = vpop.f32.mrb[0].mxu0
    %v934 = vadd.f32 %v814, %v933
    %v935 = vpop.f32.mrb[0].mxu0
    %936 = vmatprep.mubr.bf16.mxu0 0
    %937 = vmatmul.mubr.bf16.gmra.mrb[0].mxu0 %v790
    %v938 = vpop.f32.mrb[0].mxu0
    %v939 = vadd.f32 %v814, %v938
    %v940 = vpop.f32.mrb[0].mxu0
    %v941 = vpop.f32.mrb[0].mxu0
    %v942 = vadd.f32 %v814, %v941
    %v943 = vpop.f32.mrb[0].mxu0
    %944 = vmatprep.mubr.bf16.mxu0 0
    %945 = vmatmul.mubr.bf16.gmra.mrb[0].mxu0 %v791
    %v946 = vpop.f32.mrb[0].mxu0
    %v947 = vadd.f32 %v814, %v946
    %v948 = vpop.f32.mrb[0].mxu0
    %v949 = vpop.f32.mrb[0].mxu0
    %v950 = vadd.f32 %v814, %v949
    %v951 = vpop.f32.mrb[0].mxu0
    %952 = vmatprep.mubr.bf16.mxu0 0
    %953 = vmatmul.mubr.bf16.gmra.mrb[0].mxu0 %v792
    %v954 = vpop.f32.mrb[0].mxu0
    %v955 = vadd.f32 %v814, %v954
    %v956 = vpop.f32.mrb[0].mxu0
    %v957 = vpop.f32.mrb[0].mxu0
    %v958 = vadd.f32 %v814, %v957
    %v959 = vpop.f32.mrb[0].mxu0
    %960 = vdwg.mxu0
    %961 = vst [vmem:[%s8] sm:$0xff] %v899
    %962 = vst [vmem:[%s8 + $0x8] sm:$0xff] %v902
    %963 = vst [vmem:[%s8 + $0x10] sm:$0xff] %v907
    %964 = vst [vmem:[%s8 + $0x18] sm:$0xff] %v910
    %965 = vst [vmem:[%s8 + $0x20] sm:$0xff] %v915
    %966 = vst [vmem:[%s8 + $0x28] sm:$0xff] %v918
    %967 = vst [vmem:[%s8 + $0x30] sm:$0xff] %v923
    %968 = vst [vmem:[%s8 + $0x38] sm:$0xff] %v926
    %969 = vst [vmem:[%s8 + $0x40] sm:$0xff] %v931
    %970 = vst [vmem:[%s8 + $0x48] sm:$0xff] %v934
    %971 = vst [vmem:[%s8 + $0x50] sm:$0xff] %v939
    %972 = vst [vmem:[%s8 + $0x58] sm:$0xff] %v942
    %973 = vst [vmem:[%s8 + $0x60] sm:$0xff] %v947
    %974 = vst [vmem:[%s8 + $0x68] sm:$0xff] %v950
    %975 = vst [vmem:[%s8 + $0x70] sm:$0xff] %v955
    %976 = vst [vmem:[%s8 + $0x78] sm:$0xff] %v958
    // Predicated region
    $region46: #{forward.1} parent=1 // pred_check
      _
    $region47: #{forward.1} parent=1 // pred_check_branch
      %978 = sbr.rel (0) target = $region49
    $region48: #{forward.1} parent=1 // pred_region
      _
    $region49: #{forward.1} parent=1 // pred_fallthru
      _
    // Predicated region
    $region50: #{forward.1} parent=1 // pred_check
      _
    $region51: #{forward.1} parent=1 // pred_check_branch
      %980 = sbr.rel (0) target = $region53
    $region52: #{forward.1} parent=1 // pred_region
      _
    $region53: #{forward.1} parent=1 // pred_fallthru
      _
    %981 = vsyncpa [#allocation3], 1
    %982 = vsyncpa [#allocation5], 1

</llo_original>
